<compile_context>
chip_gen: v5e
topology: v5e:2x2
jax: 0.10.0
libtpu: 0.0.40
codegen_flags: <defaults>
</compile_context>

<pallas_src>
import functools

import jax
import jax.numpy as jnp
from jax.experimental import pallas as pl
from jax.experimental.pallas import tpu as pltpu


def _modulate_kernel(a1_ref, b_ref, x_ref, o_ref):
    # a1_ref / b_ref: (1, c_blk, 1) in x.dtype (pre-broadcast layout).
    # x_ref / o_ref:  (1, c_blk, hw_blk).
    o_ref[...] = x_ref[...] * a1_ref[...] + b_ref[...]


def _choose_blocks(c, hw, itemsize, budget_bytes=6 * 1024 * 1024):
    """Pick (c_block, hw_block) so one x tile stays ~<= budget.

    Prefer splitting channels with the full spatial extent per block (each
    block is then one fully contiguous HBM region -> long DMA bursts); only
    split the spatial (lane) axis when even 8 channel rows exceed the budget.
    Block dims satisfy the (8, 128) rule: c_block is a multiple of 8 or the
    full C; hw_block is a multiple of 128 or the full HW.
    """
    if c * hw * itemsize <= budget_bytes:
        return int(c), int(hw)
    row_bytes = hw * itemsize
    if 8 * row_bytes <= budget_bytes:
        c_blk = (budget_bytes // row_bytes) // 8 * 8
        return int(min(c, c_blk)), int(hw)
    hw_blk = max(128, (budget_bytes // (8 * itemsize)) // 128 * 128)
    return int(min(c, 8)), int(min(hw, hw_blk))


@functools.partial(jax.jit, static_argnames=("c_block", "hw_block"))
def sd_cascade_timestep_block(x, t, weights, biases, *, c_block=None,
                              hw_block=None):
    """x: (B, C, H, W) NCHW; t: (B, K*c_timestep);
    weights: (K, c_timestep, 2C) stacked mapper weights (in x out layout);
    biases: (K, 2C)."""
    B, C, H, W = x.shape
    HW = H * W
    K, CT, twoC = weights.shape
    assert twoC == 2 * C
    assert t.shape == (B, K * CT)

    # Fused timestep projection (tiny; hoisted out of the kernel):
    #   sum_k (t_k @ W_k + b_k)  ==  t @ stack_k(W_k) + sum_k(b_k)   (exact).
    w_flat = weights.reshape(K * CT, twoC)
    bias_sum = jnp.sum(biases.astype(jnp.float32), axis=0)
    ab = jnp.dot(t.astype(jnp.float32), w_flat.astype(jnp.float32),
                 preferred_element_type=jnp.float32) + bias_sum[None, :]
    # Pre-broadcast (B, C, 1) modulation vectors in the consumed dtype/layout.
    a1 = (1.0 + ab[:, :C]).astype(x.dtype).reshape(B, C, 1)
    bm = ab[:, C:].astype(x.dtype).reshape(B, C, 1)

    x_flat = x.reshape(B, C, HW)
    itemsize = jnp.dtype(x.dtype).itemsize

    cb, hb = _choose_blocks(C, HW, itemsize)
    if c_block is not None:
        cb = int(c_block)
    if hw_block is not None:
        hb = int(hw_block)
    n_c = pl.cdiv(C, cb)
    n_hw = pl.cdiv(HW, hb)

    flops = 2 * B * C * HW
    bytes_accessed = (2 * B * C * HW * itemsize
                      + 2 * B * C * itemsize)

    out_flat = pl.pallas_call(
        _modulate_kernel,
        out_shape=jax.ShapeDtypeStruct((B, C, HW), x.dtype),
        grid=(B, n_c, n_hw),
        in_specs=[
            pl.BlockSpec((1, cb, 1), lambda b, ci, hi: (b, ci, 0)),   # 1 + a
            pl.BlockSpec((1, cb, 1), lambda b, ci, hi: (b, ci, 0)),   # b
            pl.BlockSpec((1, cb, hb), lambda b, ci, hi: (b, ci, hi)),  # x tile
        ],
        out_specs=pl.BlockSpec((1, cb, hb), lambda b, ci, hi: (b, ci, hi)),
        compiler_params=pltpu.CompilerParams(
            dimension_semantics=("parallel", "parallel", "parallel"),
            vmem_limit_bytes=48 * 1024 * 1024),
        cost_estimate=pl.CostEstimate(
            flops=flops, transcendentals=0, bytes_accessed=bytes_accessed),
    )(a1, bm, x_flat)

    return out_flat.reshape(B, C, H, W)


def _reference(x, t, weights, biases):
    """Pure-JAX reference mirroring the PyTorch forward (sequential per-cond)."""
    B, C, H, W = x.shape
    K, CT, twoC = weights.shape
    ab = jnp.zeros((B, twoC), dtype=jnp.float32)
    for k in range(K):
        t_k = t[:, k * CT:(k + 1) * CT].astype(jnp.float32)
        ab = ab + t_k @ weights[k].astype(jnp.float32) \
            + biases[k].astype(jnp.float32)[None, :]
    a = ab[:, :C][:, :, None, None]
    b = ab[:, C:][:, :, None, None]
    return (x * (1 + a) + b).astype(x.dtype)


if __name__ == "__main__":
    # Small shapes consistent with the module: conds=["sca", "crp"] -> K = 3
    B, C, H, W = 2, 8, 16, 16
    c_timestep = 32
    conds = ["sca", "crp"]
    K = len(conds) + 1

    key = jax.random.PRNGKey(0)
    kx, kt, kw, kb = jax.random.split(key, 4)

    x = jax.random.normal(kx, (B, C, H, W), dtype=jnp.float32)
    t = jax.random.normal(kt, (B, K * c_timestep), dtype=jnp.float32)

    # Deterministic nn.Linear-style init: U(-1/sqrt(in), 1/sqrt(in))
    bound = 1.0 / (c_timestep ** 0.5)
    weights = jax.random.uniform(kw, (K, c_timestep, 2 * C),
                                 minval=-bound, maxval=bound,
                                 dtype=jnp.float32)
    biases = jax.random.uniform(kb, (K, 2 * C),
                                minval=-bound, maxval=bound,
                                dtype=jnp.float32)

    out = sd_cascade_timestep_block(x, t, weights, biases)
    out = jax.block_until_ready(out)

    ref = _reference(x, t, weights, biases)
    assert out.shape == (B, C, H, W)
    assert jnp.allclose(out, ref, atol=1e-5, rtol=1e-5), "mismatch vs reference"

    print("KERNEL_OK")
</pallas_src>

<mosaic_0001>
module attributes {stable_mosaic.version = 11 : i64} {
  func.func @_modulate_kernel(%arg0: i32, %arg1: i32, %arg2: i32, %arg3: memref<1x8x1xf32, #tpu.memory_space<vmem>>, %arg4: memref<1x8x1xf32, #tpu.memory_space<vmem>>, %arg5: memref<1x8x256xf32, #tpu.memory_space<vmem>>, %arg6: memref<1x8x256xf32, #tpu.memory_space<vmem>>) attributes {dimension_semantics = [#tpu.dimension_semantics<parallel>, #tpu.dimension_semantics<parallel>, #tpu.dimension_semantics<parallel>], iteration_bounds = array<i64: 2, 1, 1>, scalar_prefetch = 0 : i64, scratch_operands = 0 : i64, tpu.core_type = #tpu.core_type<tc>, window_params = [{transform_indices = @transform_0, window_bounds = array<i64: 1, 8, 1>}, {transform_indices = @transform_1, window_bounds = array<i64: 1, 8, 1>}, {transform_indices = @transform_2, window_bounds = array<i64: 1, 8, 256>}, {transform_indices = @transform_3, window_bounds = array<i64: 1, 8, 256>}]} {
    %c0 = arith.constant 0 : index
    %c0_0 = arith.constant 0 : index
    %c0_1 = arith.constant 0 : index
    %0 = vector.load %arg5[%c0, %c0_0, %c0_1] : memref<1x8x256xf32, #tpu.memory_space<vmem>>, vector<1x8x256xf32>
    %c0_2 = arith.constant 0 : index
    %c0_3 = arith.constant 0 : index
    %c0_4 = arith.constant 0 : index
    %1 = vector.load %arg3[%c0_2, %c0_3, %c0_4] : memref<1x8x1xf32, #tpu.memory_space<vmem>>, vector<1x8x1xf32>
    %2 = vector.broadcast %1 : vector<1x8x1xf32> to vector<1x8x256xf32>
    %3 = arith.mulf %0, %2 : vector<1x8x256xf32>
    %c0_5 = arith.constant 0 : index
    %c0_6 = arith.constant 0 : index
    %c0_7 = arith.constant 0 : index
    %4 = vector.load %arg4[%c0_5, %c0_6, %c0_7] : memref<1x8x1xf32, #tpu.memory_space<vmem>>, vector<1x8x1xf32>
    %5 = vector.broadcast %4 : vector<1x8x1xf32> to vector<1x8x256xf32>
    %6 = arith.addf %3, %5 : vector<1x8x256xf32>
    %c0_8 = arith.constant 0 : index
    %c0_9 = arith.constant 0 : index
    %c0_10 = arith.constant 0 : index
    %7 = vector.load %arg6[%c0_8, %c0_9, %c0_10] : memref<1x8x256xf32, #tpu.memory_space<vmem>>, vector<1x8x256xf32>
    tpu.vector_store %arg6[%c0_8, %c0_9, %c0_10], %6 {strides = array<i32>} : memref<1x8x256xf32, #tpu.memory_space<vmem>>, vector<1x8x256xf32>,
    return
  }
  func.func @transform_0(%arg0: i32, %arg1: i32, %arg2: i32) -> (i32, i32, i32) {
    %c0_i32 = arith.constant 0 : i32
    %c0_i32_0 = arith.constant 0 : i32
    return %arg0, %arg1, %c0_i32 : i32, i32, i32
  }
  func.func @transform_1(%arg0: i32, %arg1: i32, %arg2: i32) -> (i32, i32, i32) {
    %c0_i32 = arith.constant 0 : i32
    %c0_i32_0 = arith.constant 0 : i32
    return %arg0, %arg1, %c0_i32 : i32, i32, i32
  }
  func.func @transform_2(%arg0: i32, %arg1: i32, %arg2: i32) -> (i32, i32, i32) {
    %c0_i32 = arith.constant 0 : i32
    return %arg0, %arg1, %arg2 : i32, i32, i32
  }
  func.func @transform_3(%arg0: i32, %arg1: i32, %arg2: i32) -> (i32, i32, i32) {
    %c0_i32 = arith.constant 0 : i32
    return %arg0, %arg1, %arg2 : i32, i32, i32
  }
}

</mosaic_0001>

<llo_original>
// kernel: sd_cascade_timestep_block.1
$region0: #{sd_cascade_timestep_block.1}
  #allocation0 [shape = 'u32[]', space=smem, size = 0x4, offset = 0x4, fixed_abs, tag = 'smem constant byte address 0x4 - core index']
  #allocation1 [shape = 'u32[72,128]{1,0:T(1,128)}', space=vmem, size = 0x9000, scoped, tag = 'internal scratch']
  %s0 = inlined_call_operand.vmem [shape: f32[2,8,1], index: 0, kind: input, shape index: {}]
  %s1 = inlined_call_operand.vmem [shape: f32[2,8,1], index: 1, kind: input, shape index: {}]
  %s2 = inlined_call_operand.vmem [shape: f32[2,8,256], index: 2, kind: input, shape index: {}]
  %s3 = inlined_call_operand.vmem [shape: f32[2,8,256], index: 3, kind: output, shape index: {}]
  %s4 = sld [smem:[#allocation0]]
  $region45: #{sd_cascade_timestep_block.1} parent=0
    _
  %s6 = ssub.s32 1, %s4
  %s7 = scalar_select 0, %s6, %s4
  loop: start=0, step=1, limit=4
  $region2: #{sd_cascade_timestep_block.1} parent=0 // loop_pre_header
    _
  $region3: #{sd_cascade_timestep_block.1} parent=0 // loop_header
    %s9 = sphi 0, %s13
    %p10 = scmp.ge.s32.totalorder %s9, 4
    %s16 = sphi 0, %s35
    %s17 = sphi 0, %s31
    %s18 = sphi 0, %s27
    %s19 = sphi 0, %s16
    %s20 = sphi 0, %s17
    %s21 = sphi 0, %s18
    %s22 = sphi 0, %s19
    %s23 = sphi 0, %s20
    %s24 = sphi 0, %s21
    %s40 = sphi 0, %s42
    %s43 = sphi 0, %s40
    %s44 = sphi 0, %s43
    %s60 = sphi 0, %s44
    %s68 = sphi 0, %s70
    %s71 = sphi 0, %s68
    %s72 = sphi 0, %s71
    %s88 = sphi 0, %s72
    %s98 = sphi 0, %s100
    %s101 = sphi 0, %s98
    %s102 = sphi 0, %s101
    %s118 = sphi 0, %s102
    %s128 = sphi 0, %s130
    %s131 = sphi 0, %s128
    %s132 = sphi 0, %s131
    %s148 = sphi 0, %s132
  $region4: #{sd_cascade_timestep_block.1} parent=0 // loop_header_branch
    %12 = sbr.rel (%p10) target = $region8
  $region5: #{sd_cascade_timestep_block.1} parent=0 // loop_body
    %s14 = ssub.s32 %s9, 1
    %s15 = ssub.s32 %s9, 2
    %s25 = sadd.s32 1, %s18
    %p26 = scmp.ge.s32.totalorder %s25, 1
    %s27 = scalar_select %p26, 0, %s25
    %s28 = sadd.s32 1, %s17
    %s29 = scalar_select %p26, %s28, %s17
    %p30 = scmp.ge.s32.totalorder %s29, 1
    %s31 = scalar_select %p30, 0, %s29
    %s32 = sadd.s32 1, %s16
    %s33 = scalar_select %p30, %s32, %s16
    %p34 = scmp.ge.s32.totalorder %s33, 2
    %s35 = scalar_select %p34, 0, %s33
    %s36 = ssub.s32 %s16, %s35
    %s37 = ssub.s32 %s17, %s31
    %s38 = sor.u32 %s36, %s37
    %p39 = scmp.eq.s32.totalorder %s38, 0
    %s41 = sadd.s32 %s40, 1
    %s42 = scalar_select %p39, %s40, %s41
    %p45 = pneg %p39
    %p46 = scmp.eq.s32.totalorder %s9, 1
    %p47 = por %p45, %p46
    %p48 = scmp.ne.s32.totalorder %s40, %s43
    %p49 = scmp.eq.s32.totalorder %s9, 0
    %p50 = por %p48, %p49
    %p51 = scmp.ne.s32.totalorder %s40, %s43
    %p52 = scmp.eq.s32.totalorder %s14, 1
    %p53 = por %p51, %p52
    %p54 = scmp.ne.s32.totalorder %s43, %s44
    %p55 = scmp.eq.s32.totalorder %s14, 0
    %p56 = por %p54, %p55
    %p57 = scmp.ne.s32.totalorder %s43, %s44
    %p58 = scmp.eq.s32.totalorder %s15, 1
    %p59 = por %p57, %p58
    %p61 = scmp.ne.s32.totalorder %s44, %s60
    %p62 = scmp.eq.s32.totalorder %s15, 0
    %p63 = por %p61, %p62
    %s64 = ssub.s32 %s16, %s35
    %s65 = ssub.s32 %s17, %s31
    %s66 = sor.u32 %s64, %s65
    %p67 = scmp.eq.s32.totalorder %s66, 0
    %s69 = sadd.s32 %s68, 1
    %s70 = scalar_select %p67, %s68, %s69
    %p73 = pneg %p67
    %p74 = scmp.eq.s32.totalorder %s9, 1
    %p75 = por %p73, %p74
    %p76 = scmp.ne.s32.totalorder %s68, %s71
    %p77 = scmp.eq.s32.totalorder %s9, 0
    %p78 = por %p76, %p77
    %p79 = scmp.ne.s32.totalorder %s68, %s71
    %p80 = scmp.eq.s32.totalorder %s14, 1
    %p81 = por %p79, %p80
    %p82 = scmp.ne.s32.totalorder %s71, %s72
    %p83 = scmp.eq.s32.totalorder %s14, 0
    %p84 = por %p82, %p83
    %p85 = scmp.ne.s32.totalorder %s71, %s72
    %p86 = scmp.eq.s32.totalorder %s15, 1
    %p87 = por %p85, %p86
    %p89 = scmp.ne.s32.totalorder %s72, %s88
    %p90 = scmp.eq.s32.totalorder %s15, 0
    %p91 = por %p89, %p90
    %s92 = ssub.s32 %s16, %s35
    %s93 = ssub.s32 %s17, %s31
    %s94 = sor.u32 %s92, %s93
    %s95 = ssub.s32 %s18, %s27
    %s96 = sor.u32 %s94, %s95
    %p97 = scmp.eq.s32.totalorder %s96, 0
    %s99 = sadd.s32 %s98, 1
    %s100 = scalar_select %p97, %s98, %s99
    %p103 = pneg %p97
    %p104 = scmp.eq.s32.totalorder %s9, 1
    %p105 = por %p103, %p104
    %p106 = scmp.ne.s32.totalorder %s98, %s101
    %p107 = scmp.eq.s32.totalorder %s9, 0
    %p108 = por %p106, %p107
    %p109 = scmp.ne.s32.totalorder %s98, %s101
    %p110 = scmp.eq.s32.totalorder %s14, 1
    %p111 = por %p109, %p110
    %p112 = scmp.ne.s32.totalorder %s101, %s102
    %p113 = scmp.eq.s32.totalorder %s14, 0
    %p114 = por %p112, %p113
    %p115 = scmp.ne.s32.totalorder %s101, %s102
    %p116 = scmp.eq.s32.totalorder %s15, 1
    %p117 = por %p115, %p116
    %p119 = scmp.ne.s32.totalorder %s102, %s118
    %p120 = scmp.eq.s32.totalorder %s15, 0
    %p121 = por %p119, %p120
    %s122 = ssub.s32 %s16, %s35
    %s123 = ssub.s32 %s17, %s31
    %s124 = sor.u32 %s122, %s123
    %s125 = ssub.s32 %s18, %s27
    %s126 = sor.u32 %s124, %s125
    %p127 = scmp.eq.s32.totalorder %s126, 0
    %s129 = sadd.s32 %s128, 1
    %s130 = scalar_select %p127, %s128, %s129
    %p133 = pneg %p127
    %p134 = scmp.eq.s32.totalorder %s9, 1
    %p135 = por %p133, %p134
    %p136 = scmp.ne.s32.totalorder %s128, %s131
    %p137 = scmp.eq.s32.totalorder %s9, 0
    %p138 = por %p136, %p137
    %p139 = scmp.ne.s32.totalorder %s128, %s131
    %p140 = scmp.eq.s32.totalorder %s14, 1
    %p141 = por %p139, %p140
    %p142 = scmp.ne.s32.totalorder %s131, %s132
    %p143 = scmp.eq.s32.totalorder %s14, 0
    %p144 = por %p142, %p143
    %p145 = scmp.ne.s32.totalorder %s131, %s132
    %p146 = scmp.eq.s32.totalorder %s15, 1
    %p147 = por %p145, %p146
    %p149 = scmp.ne.s32.totalorder %s132, %s148
    %p150 = scmp.eq.s32.totalorder %s15, 0
    %p151 = por %p149, %p150
    %p152 = scmp.le.s32.totalorder 1, %s9
    %p153 = scmp.lt.s32.totalorder %s9, 3
    %p154 = pnand %p152, %p153
    %p155 = pneg %p154
    // Predicated region
    $region9: #{sd_cascade_timestep_block.1} parent=5 // pred_check
      _
    $region10: #{sd_cascade_timestep_block.1} parent=5 // pred_check_branch
      %157 = sbr.rel (%p154) target = $region12
    $region11: #{sd_cascade_timestep_block.1} parent=5 // pred_region
      %s158 = ssub.s32 %s9, 1
    $region12: #{sd_cascade_timestep_block.1} parent=5 // pred_fallthru
      _
    %p159 = scmp.lt.s32.totalorder %s9, 2
    // Predicated region
    $region13: #{sd_cascade_timestep_block.1} parent=5 // pred_check
      %p160 = pneg %p159
    $region14: #{sd_cascade_timestep_block.1} parent=5 // pred_check_branch
      %162 = sbr.rel (%p160) target = $region16
    $region15: #{sd_cascade_timestep_block.1} parent=5 // pred_region
      // Predicated region
      $region17: #{sd_cascade_timestep_block.1} parent=15 // pred_check
        %p163 = pneg %p50
      $region18: #{sd_cascade_timestep_block.1} parent=15 // pred_check_branch
        %165 = sbr.rel (%p163) target = $region20
      $region19: #{sd_cascade_timestep_block.1} parent=15 // pred_region
        %p166 = scmp.lt.s32.totalorder %s16, 1
        %s167 = scalar_select %p166, %s16, 1
        %p168 = scmp.lt.s32.totalorder %s17, 0
        %s169 = scalar_select %p168, %s17, 0
        %s170 = sadd.s32 %s169, %s167
        %s171 = smul.addr %s170, 8
        %s172 = scalar_lea.vmem %s0, %s171
      $region20: #{sd_cascade_timestep_block.1} parent=15 // pred_fallthru
        _
      // Predicated region
      $region21: #{sd_cascade_timestep_block.1} parent=15 // pred_check
        %p173 = pneg %p78
      $region22: #{sd_cascade_timestep_block.1} parent=15 // pred_check_branch
        %175 = sbr.rel (%p173) target = $region24
      $region23: #{sd_cascade_timestep_block.1} parent=15 // pred_region
        %p176 = scmp.lt.s32.totalorder %s16, 1
        %s177 = scalar_select %p176, %s16, 1
        %p178 = scmp.lt.s32.totalorder %s17, 0
        %s179 = scalar_select %p178, %s17, 0
        %s180 = sadd.s32 %s179, %s177
        %s181 = smul.addr %s180, 8
        %s182 = scalar_lea.vmem %s1, %s181
      $region24: #{sd_cascade_timestep_block.1} parent=15 // pred_fallthru
        _
      // Predicated region
      $region25: #{sd_cascade_timestep_block.1} parent=15 // pred_check
        %p183 = pneg %p108
      $region26: #{sd_cascade_timestep_block.1} parent=15 // pred_check_branch
        %185 = sbr.rel (%p183) target = $region28
      $region27: #{sd_cascade_timestep_block.1} parent=15 // pred_region
        %s186 = smul.u32 2, %s18
        %p187 = scmp.lt.s32.totalorder %s16, 1
        %s188 = scalar_select %p187, %s16, 1
        %p189 = scmp.lt.s32.totalorder %s17, 0
        %s190 = scalar_select %p189, %s17, 0
        %p191 = scmp.lt.s32.totalorder %s186, 1
        %s192 = scalar_select %p191, %s186, 1
        %s193 = smul.addr %s190, 2
        %s194 = sadd.s32 %s192, %s193
        %s195 = smul.addr %s188, 2
        %s196 = sadd.s32 %s194, %s195
        %s197 = smul.addr %s196, 8
        %s198 = scalar_lea.vmem %s2, %s197
        %s199 = smul.u32 2, %s18
      $region28: #{sd_cascade_timestep_block.1} parent=15 // pred_fallthru
        _
    $region16: #{sd_cascade_timestep_block.1} parent=5 // pred_fallthru
      _
    %p200 = scmp.le.s32.totalorder 1, %s9
    %p201 = scmp.lt.s32.totalorder %s9, 3
    %p202 = pnand %p200, %p201
    %p203 = pneg %p202
    // Predicated region
    $region29: #{sd_cascade_timestep_block.1} parent=5 // pred_check
      _
    $region30: #{sd_cascade_timestep_block.1} parent=5 // pred_check_branch
      %205 = sbr.rel (%p202) target = $region32
    $region31: #{sd_cascade_timestep_block.1} parent=5 // pred_region
      %s206 = ssub.s32 %s9, 1
      %p207 = scmp.lt.s32.totalorder %s19, 1
      %s208 = scalar_select %p207, %s19, 1
      %p209 = scmp.lt.s32.totalorder %s20, 0
      %s210 = scalar_select %p209, %s20, 0
      %s211 = sadd.s32 %s210, %s208
      %s212 = smul.addr %s211, 8
      %s213 = scalar_lea.vmem %s0, %s212
      %p214 = pneg %p56
      %p215 = pneg %p53
      %p216 = scmp.lt.s32.totalorder %s19, 1
      %s217 = scalar_select %p216, %s19, 1
      %p218 = scmp.lt.s32.totalorder %s20, 0
      %s219 = scalar_select %p218, %s20, 0
      %s220 = sadd.s32 %s219, %s217
      %s221 = smul.addr %s220, 8
      %s222 = scalar_lea.vmem %s1, %s221
      %p223 = pneg %p84
      %p224 = pneg %p81
      %s225 = smul.u32 2, %s21
      %p226 = scmp.lt.s32.totalorder %s19, 1
      %s227 = scalar_select %p226, %s19, 1
      %p228 = scmp.lt.s32.totalorder %s20, 0
      %s229 = scalar_select %p228, %s20, 0
      %p230 = scmp.lt.s32.totalorder %s225, 1
      %s231 = scalar_select %p230, %s225, 1
      %s232 = smul.addr %s229, 2
      %s233 = sadd.s32 %s231, %s232
      %s234 = smul.addr %s227, 2
      %s235 = sadd.s32 %s233, %s234
      %s236 = smul.addr %s235, 8
      %s237 = scalar_lea.vmem %s2, %s236
      %p238 = pneg %p114
      %p239 = pneg %p111
      %p240 = pneg %p144
      %p241 = pneg %p141
      %s242 = smul.u32 2, %s21
      %p243 = scmp.lt.s32.totalorder %s19, 1
      %s244 = scalar_select %p243, %s19, 1
      %p245 = scmp.lt.s32.totalorder %s20, 0
      %s246 = scalar_select %p245, %s20, 0
      %p247 = scmp.lt.s32.totalorder %s242, 1
      %s248 = scalar_select %p247, %s242, 1
      %s249 = smul.addr %s246, 2
      %s250 = sadd.s32 %s248, %s249
      %s251 = smul.addr %s244, 2
      %s252 = sadd.s32 %s250, %s251
      %s253 = smul.addr %s252, 8
      %s254 = scalar_lea.vmem %s3, %s253
      %p255 = scmp.lt.s32.totalorder %s19, 1
      %s256 = scalar_select %p255, %s19, 1
      %p257 = scmp.lt.s32.totalorder %s20, 0
      %s258 = scalar_select %p257, %s20, 0
      %s259 = sadd.s32 %s258, %s256
      %s260 = smul.addr %s259, 8
      %s261 = scalar_lea.vmem %s0, %s260
      %p262 = scmp.lt.s32.totalorder %s19, 1
      %s263 = scalar_select %p262, %s19, 1
      %p264 = scmp.lt.s32.totalorder %s20, 0
      %s265 = scalar_select %p264, %s20, 0
      %s266 = sadd.s32 %s265, %s263
      %s267 = smul.addr %s266, 8
      %s268 = scalar_lea.vmem %s1, %s267
      %s269 = smul.u32 2, %s21
      %p270 = scmp.lt.s32.totalorder %s19, 1
      %s271 = scalar_select %p270, %s19, 1
      %p272 = scmp.lt.s32.totalorder %s20, 0
      %s273 = scalar_select %p272, %s20, 0
      %p274 = scmp.lt.s32.totalorder %s269, 1
      %s275 = scalar_select %p274, %s269, 1
      %s276 = smul.addr %s273, 2
      %s277 = sadd.s32 %s275, %s276
      %s278 = smul.addr %s271, 2
      %s279 = sadd.s32 %s277, %s278
      %s280 = smul.addr %s279, 8
      %s281 = scalar_lea.vmem %s2, %s280
      %s282 = smul.u32 2, %s21
      %s283 = smul.u32 2, %s21
      %p284 = scmp.lt.s32.totalorder %s19, 1
      %s285 = scalar_select %p284, %s19, 1
      %p286 = scmp.lt.s32.totalorder %s20, 0
      %s287 = scalar_select %p286, %s20, 0
      %p288 = scmp.lt.s32.totalorder %s283, 1
      %s289 = scalar_select %p288, %s283, 1
      %s290 = smul.addr %s287, 2
      %s291 = sadd.s32 %s289, %s290
      %s292 = smul.addr %s285, 2
      %s293 = sadd.s32 %s291, %s292
      %s294 = smul.addr %s293, 8
      %s295 = scalar_lea.vmem %s3, %s294
      %s296 = smul.u32 2, %s21
      %v297 = vld [vmem:[%s281] sm:$0xff]
      %v298 = vld [vmem:[%s281 + $0x8] sm:$0xff]
      %v299 = vld [vmem:[%s261] sm:$0xff]
      %301 = vset.pattern.permute.xlu0 0
      %302 = vperm.xlu0 %301, %v299
      %v303 = vpop.permute.xlu0 %302
      %v305 = vmul.f32 %v297, %v303
      %v306 = vmul.f32 %v298, %v303
      %v307 = vld [vmem:[%s268] sm:$0xff]
      %309 = vset.pattern.permute.xlu0 0
      %310 = vperm.xlu0 %309, %v307
      %v311 = vpop.permute.xlu0 %310
      %v313 = vadd.f32 %v305, %v311
      %v314 = vadd.f32 %v306, %v311
      %315 = vst [vmem:[%s295] sm:$0xff] %v313
      %316 = vst [vmem:[%s295 + $0x8] sm:$0xff] %v314
      %s317 = smul.u32 2, %s21
      %p318 = scmp.lt.s32.totalorder %s19, 1
      %s319 = scalar_select %p318, %s19, 1
      %p320 = scmp.lt.s32.totalorder %s20, 0
      %s321 = scalar_select %p320, %s20, 0
      %p322 = scmp.lt.s32.totalorder %s317, 1
      %s323 = scalar_select %p322, %s317, 1
      %s324 = smul.addr %s321, 2
      %s325 = sadd.s32 %s323, %s324
      %s326 = smul.addr %s319, 2
      %s327 = sadd.s32 %s325, %s326
      %s328 = smul.addr %s327, 8
      %s329 = scalar_lea.vmem %s3, %s328
      // Predicated region
      $region33: #{sd_cascade_timestep_block.1} parent=31 // pred_check
        %p330 = pneg %p141
      $region34: #{sd_cascade_timestep_block.1} parent=31 // pred_check_branch
        %332 = sbr.rel (%p330) target = $region36
      $region35: #{sd_cascade_timestep_block.1} parent=31 // pred_region
        %s333 = smul.u32 2, %s21
      $region36: #{sd_cascade_timestep_block.1} parent=31 // pred_fallthru
        _
    $region32: #{sd_cascade_timestep_block.1} parent=5 // pred_fallthru
      _
    %p334 = scmp.le.s32.totalorder 2, %s9
    // Predicated region
    $region37: #{sd_cascade_timestep_block.1} parent=5 // pred_check
      %p335 = pneg %p334
    $region38: #{sd_cascade_timestep_block.1} parent=5 // pred_check_branch
      %337 = sbr.rel (%p335) target = $region40
    $region39: #{sd_cascade_timestep_block.1} parent=5 // pred_region
      %s338 = ssub.s32 %s9, 2
      // Predicated region
      $region41: #{sd_cascade_timestep_block.1} parent=39 // pred_check
        %p339 = pneg %p147
      $region42: #{sd_cascade_timestep_block.1} parent=39 // pred_check_branch
        %341 = sbr.rel (%p339) target = $region44
      $region43: #{sd_cascade_timestep_block.1} parent=39 // pred_region
        %s342 = smul.u32 2, %s24
        %p343 = scmp.lt.s32.totalorder %s22, 1
        %s344 = scalar_select %p343, %s22, 1
        %p345 = scmp.lt.s32.totalorder %s23, 0
        %s346 = scalar_select %p345, %s23, 0
        %p347 = scmp.lt.s32.totalorder %s342, 1
        %s348 = scalar_select %p347, %s342, 1
        %s349 = smul.addr %s346, 2
        %s350 = sadd.s32 %s348, %s349
        %s351 = smul.addr %s344, 2
        %s352 = sadd.s32 %s350, %s351
        %s353 = smul.addr %s352, 8
        %s354 = scalar_lea.vmem %s3, %s353
      $region44: #{sd_cascade_timestep_block.1} parent=39 // pred_fallthru
        _
    $region40: #{sd_cascade_timestep_block.1} parent=5 // pred_fallthru
      _
  $region6: #{sd_cascade_timestep_block.1} parent=0 // loop_footer
    %s13 = sadd.s32 1, %s9
  $region7: #{sd_cascade_timestep_block.1} parent=0 // loop_footer_branch
    %8 = sbr.rel target = $region3
  $region8: #{sd_cascade_timestep_block.1} parent=0 // loop_exit
    _

</llo_original>
